<compile_context>
chip_gen: v6e
topology: v6e:2x2x1
jax: 0.10.0
libtpu: 0.0.40
codegen_flags: <defaults>
</compile_context>

<pallas_src>
import math

import jax
import jax.numpy as jnp
from jax.experimental import pallas as pl
from jax.experimental.pallas import tpu as pltpu


_LANE = 128


def _round_up(x, m):
    return ((x + m - 1) // m) * m


def _has_bf16_vpu():
    """True on chips whose VALUs handle bf16 natively (v6e, v7x).

    v5e and older have no bf16 VPU, so the bias+ReLU epilogue stays f32 there.
    Conservative (f32 epilogue) on anything we don't recognize.
    """
    try:
        kind = jax.devices()[0].device_kind.lower()
    except Exception:
        return False
    return ("v6" in kind) or ("v7" in kind)


def _actor_mlp_kernel(x_ref,
                      w1_ref, b1_ref,
                      w2_ref, b2_ref,
                      w3_ref, b3_ref,
                      w4_ref, b4_ref,
                      o_ref):
    """4-layer MLP on one (batch_tile, D) obs tile.

    Layers 1-3: bf16 MXU matmuls with f32 accumulation.  The bias+ReLU
    epilogue runs in the dtype of the bias refs: bf16 on v6e/v7x (bf16 VALU,
    fewer vreg passes, no extra cast), f32 on v5e.
    Layer 4 (H -> 1): VPU multiply + XLU lane reduction against a (1, H) f32
    weight row; the (batch_tile, 1) result is stored directly (the masked
    narrow store is only batch_tile*4 bytes per tile).
    """
    ep = b1_ref.dtype                                           # bf16 or f32

    h = jnp.dot(x_ref[...], w1_ref[...],
                preferred_element_type=jnp.float32)             # (TB, H) f32
    h = jnp.maximum(h.astype(ep) + b1_ref[...], 0.0)

    h = jnp.dot(h.astype(jnp.bfloat16), w2_ref[...],
                preferred_element_type=jnp.float32)
    h = jnp.maximum(h.astype(ep) + b2_ref[...], 0.0)

    h = jnp.dot(h.astype(jnp.bfloat16), w3_ref[...],
                preferred_element_type=jnp.float32)
    h = jnp.maximum(h.astype(ep) + b3_ref[...], 0.0)

    # y = h @ W4^T + b4 with W4 as a (1, H) f32 row -> VPU mul + XLU reduce.
    y = jnp.sum(h.astype(jnp.float32) * w4_ref[...],
                axis=-1, keepdims=True) + b4_ref[0]             # (TB, 1) f32
    o_ref[...] = y


def prepare_actor_params(params, *, bf16_epilogue=None):
    """Cast the f32 master weights once into the dtypes the kernel consumes.

    W1-W3 -> bf16 MXU operands; W4 stays an f32 (1, H) row for the VPU head;
    b1-b3 are in the epilogue dtype (bf16 on v6e/v7x, f32 on v5e); b4 is a
    (1,) f32 scalar that lives in SMEM inside the kernel.
    """
    if bf16_epilogue is None:
        bf16_epilogue = _has_bf16_vpu()
    ep = jnp.bfloat16 if bf16_epilogue else jnp.float32
    H = params["W1"].shape[1]
    return {
        "W1": params["W1"].astype(jnp.bfloat16),
        "W2": params["W2"].astype(jnp.bfloat16),
        "W3": params["W3"].astype(jnp.bfloat16),
        "W4": params["W4"].reshape(1, H).astype(jnp.float32),
        "b1": params["b1"].reshape(1, H).astype(ep),
        "b2": params["b2"].reshape(1, H).astype(ep),
        "b3": params["b3"].reshape(1, H).astype(ep),
        "b4": params["b4"].reshape(1).astype(jnp.float32),
    }


def actor_forward(obs, params, *, batch_tile=4096, bf16_epilogue=None,
                  vmem_limit_bytes=None):
    """obs: (B, D) float32; params: f32 masters or prepare_actor_params output.

    Returns (B, 1) float32, matching torch Actor.forward(obs) to bf16-operand
    tolerance.
    """
    B, D = obs.shape
    if params["W1"].dtype != jnp.bfloat16:          # raw f32 masters -> cast once
        params = prepare_actor_params(params, bf16_epilogue=bf16_epilogue)
    H = params["W1"].shape[1]
    ep_bytes = jnp.dtype(params["b1"].dtype).itemsize

    # --- batch tiling --------------------------------------------------------
    # Per-grid-step overhead is ~0.35 us, so use big tiles (up to 4096 rows,
    # only a few MiB each), with a 128-row floor so blocks stay lane/sublane
    # aligned.  Keep >= 2 grid steps when the batch allows it so the "parallel"
    # axis can be sharded across v7x's two TensorCores.
    b_round = _round_up(B, _LANE)
    tile = _round_up(max(_LANE, min(int(batch_tile), 4096)), _LANE)
    n_steps = -(-b_round // tile)
    if n_steps == 1 and b_round >= 2 * _LANE:
        n_steps = 2
    tile = _round_up(-(-b_round // n_steps), _LANE)
    B_pad = tile * n_steps

    # obs is the dominant HBM stream: ship it as bf16 (halves input DMA bytes
    # and drops the in-kernel cast).  Padded rows compute garbage that is
    # sliced off below — never consume the unsliced padded output.
    obs = obs.astype(jnp.bfloat16)
    if B_pad != B:
        obs = jnp.pad(obs, ((0, B_pad - B), (0, 0)))

    def rep(shape):
        # Same whole-array block every grid step -> weights stay VMEM-resident.
        return pl.BlockSpec(shape, lambda i: (0, 0))

    in_specs = [
        pl.BlockSpec((tile, D), lambda i: (i, 0)),          # obs tile (bf16)
        rep((D, H)), rep((1, H)),                           # layer 1
        rep((H, H)), rep((1, H)),                           # layer 2
        rep((H, H)), rep((1, H)),                           # layer 3
        rep((1, H)),                                        # layer 4 weight row
        pl.BlockSpec(memory_space=pltpu.MemorySpace.SMEM),  # layer 4 bias scalar
    ]
    out_specs = pl.BlockSpec((tile, 1), lambda i: (i, 0))

    if vmem_limit_bytes is None:
        # Derive from the actual per-tile footprint (a few MiB) and cap at
        # 32 MiB — v7x has only 64 MiB physical VMEM; v5e/v6e don't need more.
        per_tile = (2 * tile * D * 2                        # obs, double-buffered
                    + (D * H + 2 * H * H) * 2               # resident bf16 weights
                    + 3 * H * ep_bytes + H * 4 + 4          # biases + W4 row + b4
                    + 2 * tile * 4                          # output, double-buffered
                    + 4 * tile * H * 4)                     # live f32 intermediates
        vmem_limit_bytes = int(min(max(2 * per_tile, 8 << 20), 32 << 20))

    flops = 2 * B_pad * (D * H + 2 * H * H + H)
    bytes_accessed = int(B_pad * D * 2                      # bf16 obs
                         + (D * H + 2 * H * H) * 2          # bf16 weights
                         + 3 * H * ep_bytes + H * 4 + 4     # biases + W4 + b4
                         + B_pad * 4)                       # f32 output

    out = pl.pallas_call(
        _actor_mlp_kernel,
        out_shape=jax.ShapeDtypeStruct((B_pad, 1), jnp.float32),
        grid_spec=pltpu.PrefetchScalarGridSpec(
            num_scalar_prefetch=0,
            grid=(n_steps,),
            in_specs=in_specs,
            out_specs=out_specs,
        ),
        compiler_params=pltpu.CompilerParams(
            dimension_semantics=("parallel",),
            vmem_limit_bytes=vmem_limit_bytes,
        ),
        cost_estimate=pl.CostEstimate(
            flops=flops, transcendentals=0, bytes_accessed=bytes_accessed),
    )(obs, params["W1"], params["b1"], params["W2"], params["b2"],
      params["W3"], params["b3"], params["W4"], params["b4"])

    return out[:B]


def init_actor_params(key, dim_observation, hidden_size=128):
    """torch.nn.Linear-style init: U(-1/sqrt(fan_in), +1/sqrt(fan_in)), f32 masters.

    W1..W3 are stored transposed vs. PyTorch as (in_features, out_features);
    W4 is the PyTorch-native (1, hidden) row used by the VPU head.
    """
    D, H = dim_observation, hidden_size
    shapes = [
        ("W1", (D, H), D), ("b1", (1, H), D),
        ("W2", (H, H), H), ("b2", (1, H), H),
        ("W3", (H, H), H), ("b3", (1, H), H),
        ("W4", (1, H), H), ("b4", (1,), H),
    ]
    params = {}
    for name, shape, fan_in in shapes:
        key, sub = jax.random.split(key)
        bound = 1.0 / math.sqrt(fan_in)
        params[name] = jax.random.uniform(sub, shape, jnp.float32, -bound, bound)
    return params


if __name__ == "__main__":
    key = jax.random.PRNGKey(0)
    k_obs, k_obs2, k_params = jax.random.split(key, 3)

    dim_observation = 32
    hidden_size = 128          # fixed by the module's default
    batch = 20                 # not a tile multiple -> exercises padding

    params = init_actor_params(k_params, dim_observation, hidden_size)
    kernel_params = prepare_actor_params(params)     # cast weights once

    # Reference in plain f32 JAX (same math as the PyTorch module).
    def ref(x, p):
        h = jnp.maximum(x @ p["W1"] + p["b1"], 0.0)
        h = jnp.maximum(h @ p["W2"] + p["b2"], 0.0)
        h = jnp.maximum(h @ p["W3"] + p["b3"], 0.0)
        return h @ p["W4"].T + p["b4"]

    # Case 1: small batch -> single 128-row tile (padding path).
    obs = jax.random.normal(k_obs, (batch, dim_observation), jnp.float32)
    out = actor_forward(obs, kernel_params)
    jax.block_until_ready(out)
    expected = ref(obs, params)
    assert out.shape == (batch, 1)
    # bf16 MXU operands (f32 accumulation) + possibly bf16 epilogue.
    assert jnp.allclose(out, expected, atol=5e-2, rtol=5e-2), (
        float(jnp.max(jnp.abs(out - expected))))

    # Case 2: larger batch -> >= 2 grid steps (multi-tile / megacore path).
    obs2 = jax.random.normal(k_obs2, (300, dim_observation), jnp.float32)
    out2 = actor_forward(obs2, kernel_params)
    jax.block_until_ready(out2)
    expected2 = ref(obs2, params)
    assert out2.shape == (300, 1)
    assert jnp.allclose(out2, expected2, atol=5e-2, rtol=5e-2), (
        float(jnp.max(jnp.abs(out2 - expected2))))

    print("KERNEL_OK")
</pallas_src>

<mosaic_0001>
module attributes {stable_mosaic.version = 11 : i64} {
  func.func @_actor_mlp_kernel(%arg0: i32, %arg1: memref<128x32xbf16, #tpu.memory_space<vmem>>, %arg2: memref<32x128xbf16, #tpu.memory_space<vmem>>, %arg3: memref<1x128xf32, #tpu.memory_space<vmem>>, %arg4: memref<128x128xbf16, #tpu.memory_space<vmem>>, %arg5: memref<1x128xf32, #tpu.memory_space<vmem>>, %arg6: memref<128x128xbf16, #tpu.memory_space<vmem>>, %arg7: memref<1x128xf32, #tpu.memory_space<vmem>>, %arg8: memref<1x128xf32, #tpu.memory_space<vmem>>, %arg9: memref<1xf32, #tpu.memory_space<smem>>, %arg10: memref<128x1xf32, #tpu.memory_space<vmem>>) attributes {dimension_semantics = [#tpu.dimension_semantics<parallel>], iteration_bounds = array<i64: 1>, scalar_prefetch = 0 : i64, scratch_operands = 0 : i64, tpu.core_type = #tpu.core_type<tc>, window_params = [{transform_indices = @transform_0, window_bounds = array<i64: 128, 32>}, {pipeline_mode = #tpu.pipeline_mode<synchronous>, transform_indices = @transform_1, window_bounds = array<i64: 32, 128>}, {pipeline_mode = #tpu.pipeline_mode<synchronous>, transform_indices = @transform_2, window_bounds = array<i64: 1, 128>}, {pipeline_mode = #tpu.pipeline_mode<synchronous>, transform_indices = @transform_3, window_bounds = array<i64: 128, 128>}, {pipeline_mode = #tpu.pipeline_mode<synchronous>, transform_indices = @transform_4, window_bounds = array<i64: 1, 128>}, {pipeline_mode = #tpu.pipeline_mode<synchronous>, transform_indices = @transform_5, window_bounds = array<i64: 128, 128>}, {pipeline_mode = #tpu.pipeline_mode<synchronous>, transform_indices = @transform_6, window_bounds = array<i64: 1, 128>}, {pipeline_mode = #tpu.pipeline_mode<synchronous>, transform_indices = @transform_7, window_bounds = array<i64: 1, 128>}, {transform_indices = @transform_8, window_bounds = array<i64: 1>}, {transform_indices = @transform_9, window_bounds = array<i64: 128, 1>}]} {
    %c0 = arith.constant 0 : index
    %c0_0 = arith.constant 0 : index
    %0 = vector.load %arg1[%c0, %c0_0] : memref<128x32xbf16, #tpu.memory_space<vmem>>, vector<128x32xbf16>
    %c0_1 = arith.constant 0 : index
    %c0_2 = arith.constant 0 : index
    %1 = vector.load %arg2[%c0_1, %c0_2] : memref<32x128xbf16, #tpu.memory_space<vmem>>, vector<32x128xbf16>
    %cst = arith.constant dense<0.000000e+00> : vector<128x128xf32>
    %2 = tpu.matmul %0, %1, %cst {dimension_numbers = #tpu.dot_dimension_numbers<[1], [0], [0], [1], [0, 0, 1, 1], [], []>} : vector<128x32xbf16>, vector<32x128xbf16>, vector<128x128xf32> -> vector<128x128xf32>
    %c0_3 = arith.constant 0 : index
    %c0_4 = arith.constant 0 : index
    %3 = vector.load %arg3[%c0_3, %c0_4] : memref<1x128xf32, #tpu.memory_space<vmem>>, vector<1x128xf32>
    %4 = vector.broadcast %3 : vector<1x128xf32> to vector<128x128xf32>
    %5 = arith.addf %2, %4 : vector<128x128xf32>
    %cst_5 = arith.constant 0.000000e+00 : f32
    %6 = vector.broadcast %cst_5 : f32 to vector<128x128xf32>
    %7 = arith.maximumf %5, %6 : vector<128x128xf32>
    %8 = arith.truncf %7 : vector<128x128xf32> to vector<128x128xbf16>
    %c0_6 = arith.constant 0 : index
    %c0_7 = arith.constant 0 : index
    %9 = vector.load %arg4[%c0_6, %c0_7] : memref<128x128xbf16, #tpu.memory_space<vmem>>, vector<128x128xbf16>
    %cst_8 = arith.constant dense<0.000000e+00> : vector<128x128xf32>
    %10 = tpu.matmul %8, %9, %cst_8 {dimension_numbers = #tpu.dot_dimension_numbers<[1], [0], [0], [1], [0, 0, 1, 1], [], []>} : vector<128x128xbf16>, vector<128x128xbf16>, vector<128x128xf32> -> vector<128x128xf32>
    %c0_9 = arith.constant 0 : index
    %c0_10 = arith.constant 0 : index
    %11 = vector.load %arg5[%c0_9, %c0_10] : memref<1x128xf32, #tpu.memory_space<vmem>>, vector<1x128xf32>
    %12 = vector.broadcast %11 : vector<1x128xf32> to vector<128x128xf32>
    %13 = arith.addf %10, %12 : vector<128x128xf32>
    %cst_11 = arith.constant 0.000000e+00 : f32
    %14 = vector.broadcast %cst_11 : f32 to vector<128x128xf32>
    %15 = arith.maximumf %13, %14 : vector<128x128xf32>
    %16 = arith.truncf %15 : vector<128x128xf32> to vector<128x128xbf16>
    %c0_12 = arith.constant 0 : index
    %c0_13 = arith.constant 0 : index
    %17 = vector.load %arg6[%c0_12, %c0_13] : memref<128x128xbf16, #tpu.memory_space<vmem>>, vector<128x128xbf16>
    %cst_14 = arith.constant dense<0.000000e+00> : vector<128x128xf32>
    %18 = tpu.matmul %16, %17, %cst_14 {dimension_numbers = #tpu.dot_dimension_numbers<[1], [0], [0], [1], [0, 0, 1, 1], [], []>} : vector<128x128xbf16>, vector<128x128xbf16>, vector<128x128xf32> -> vector<128x128xf32>
    %c0_15 = arith.constant 0 : index
    %c0_16 = arith.constant 0 : index
    %19 = vector.load %arg7[%c0_15, %c0_16] : memref<1x128xf32, #tpu.memory_space<vmem>>, vector<1x128xf32>
    %20 = vector.broadcast %19 : vector<1x128xf32> to vector<128x128xf32>
    %21 = arith.addf %18, %20 : vector<128x128xf32>
    %cst_17 = arith.constant 0.000000e+00 : f32
    %22 = vector.broadcast %cst_17 : f32 to vector<128x128xf32>
    %23 = arith.maximumf %21, %22 : vector<128x128xf32>
    %c0_18 = arith.constant 0 : index
    %c0_19 = arith.constant 0 : index
    %24 = vector.load %arg8[%c0_18, %c0_19] : memref<1x128xf32, #tpu.memory_space<vmem>>, vector<1x128xf32>
    %25 = vector.broadcast %24 : vector<1x128xf32> to vector<128x128xf32>
    %26 = arith.mulf %23, %25 : vector<128x128xf32>
    %cst_20 = arith.constant dense<0.000000e+00> : vector<128xf32>
    %27 = vector.multi_reduction <add>, %26, %cst_20 [1] : vector<128x128xf32> to vector<128xf32>
    %28 = vector.shape_cast %27 : vector<128xf32> to vector<128x1xf32>
    %c0_21 = arith.constant 0 : index
    %29 = memref.load %arg9[%c0_21] : memref<1xf32, #tpu.memory_space<smem>>
    %30 = vector.broadcast %29 : f32 to vector<128x1xf32>
    %31 = arith.addf %28, %30 : vector<128x1xf32>
    %c0_22 = arith.constant 0 : index
    %c0_23 = arith.constant 0 : index
    %32 = vector.load %arg10[%c0_22, %c0_23] : memref<128x1xf32, #tpu.memory_space<vmem>>, vector<128x1xf32>
    tpu.vector_store %arg10[%c0_22, %c0_23], %31 {strides = array<i32>} : memref<128x1xf32, #tpu.memory_space<vmem>>, vector<128x1xf32>,
    return
  }
  func.func @transform_0(%arg0: i32) -> (i32, i32) {
    %c0_i32 = arith.constant 0 : i32
    %c0_i32_0 = arith.constant 0 : i32
    return %arg0, %c0_i32 : i32, i32
  }
  func.func @transform_1(%arg0: i32) -> (i32, i32) {
    %c0_i32 = arith.constant 0 : i32
    %c0_i32_0 = arith.constant 0 : i32
    %c0_i32_1 = arith.constant 0 : i32
    return %c0_i32, %c0_i32_0 : i32, i32
  }
  func.func @transform_2(%arg0: i32) -> (i32, i32) {
    %c0_i32 = arith.constant 0 : i32
    %c0_i32_0 = arith.constant 0 : i32
    %c0_i32_1 = arith.constant 0 : i32
    return %c0_i32, %c0_i32_0 : i32, i32
  }
  func.func @transform_3(%arg0: i32) -> (i32, i32) {
    %c0_i32 = arith.constant 0 : i32
    %c0_i32_0 = arith.constant 0 : i32
    %c0_i32_1 = arith.constant 0 : i32
    return %c0_i32, %c0_i32_0 : i32, i32
  }
  func.func @transform_4(%arg0: i32) -> (i32, i32) {
    %c0_i32 = arith.constant 0 : i32
    %c0_i32_0 = arith.constant 0 : i32
    %c0_i32_1 = arith.constant 0 : i32
    return %c0_i32, %c0_i32_0 : i32, i32
  }
  func.func @transform_5(%arg0: i32) -> (i32, i32) {
    %c0_i32 = arith.constant 0 : i32
    %c0_i32_0 = arith.constant 0 : i32
    %c0_i32_1 = arith.constant 0 : i32
    return %c0_i32, %c0_i32_0 : i32, i32
  }
  func.func @transform_6(%arg0: i32) -> (i32, i32) {
    %c0_i32 = arith.constant 0 : i32
    %c0_i32_0 = arith.constant 0 : i32
    %c0_i32_1 = arith.constant 0 : i32
    return %c0_i32, %c0_i32_0 : i32, i32
  }
  func.func @transform_7(%arg0: i32) -> (i32, i32) {
    %c0_i32 = arith.constant 0 : i32
    %c0_i32_0 = arith.constant 0 : i32
    %c0_i32_1 = arith.constant 0 : i32
    return %c0_i32, %c0_i32_0 : i32, i32
  }
  func.func @transform_8(%arg0: i32) -> i32 {
    %c0_i32 = arith.constant 0 : i32
    %c0_i32_0 = arith.constant 0 : i32
    return %c0_i32 : i32
  }
  func.func @transform_9(%arg0: i32) -> (i32, i32) {
    %c0_i32 = arith.constant 0 : i32
    %c0_i32_0 = arith.constant 0 : i32
    return %arg0, %c0_i32 : i32, i32
  }
}

</mosaic_0001>

<llo_original>
// kernel: tpu_custom_call.1
$region0: #{tpu_custom_call.1}
  #allocation0 [shape = 'u32[]', space=smem, size = 0x4, offset = 0x4, fixed_abs, tag = 'smem constant byte address 0x4 - core index']
  #allocation1 [shape = 'u32[144,128]{1,0:T(1,128)}', space=vmem, size = 0x12000, scoped, tag = 'internal scratch']
  #allocation2 [shape = 'f32[1]{0:T(128)S(6)}', space=smem, size = 0x200, scoped, tag = 'scoped memory for tpu_custom_call.1']
  %s0 = inlined_call_operand.vmem [shape: bf16[128,32], index: 0, kind: input, shape index: {}]
  %s1 = inlined_call_operand.vmem [shape: bf16[32,128], index: 1, kind: input, shape index: {}]
  %s2 = inlined_call_operand.vmem [shape: f32[1,128], index: 2, kind: input, shape index: {}]
  %s3 = inlined_call_operand.vmem [shape: bf16[128,128], index: 3, kind: input, shape index: {}]
  %s4 = inlined_call_operand.vmem [shape: f32[1,128], index: 4, kind: input, shape index: {}]
  %s5 = inlined_call_operand.hbm [shape: bf16[128,128], index: 5, kind: input, shape index: {}]
  %s6 = inlined_call_operand.vmem [shape: f32[1,128], index: 6, kind: input, shape index: {}]
  %s7 = inlined_call_operand.vmem [shape: f32[1,128], index: 7, kind: input, shape index: {}]
  %s8 = inlined_call_operand.<no memory space> [shape: f32[1], index: 8, kind: input, shape index: {}]
  %s9 = inlined_call_operand.vmem [shape: f32[128,1], index: 9, kind: output, shape index: {}]
  %s10 = sld [smem:[#allocation0]]
  $region50: #{tpu_custom_call.1} parent=0
    _
  %s12 = ssub.s32 1, %s10
  %s13 = scalar_select 0, %s12, %s10
  %14 = sst [smem:[#allocation2]] %s8
  $region1: #{tpu_custom_call.1} parent=0
    #allocation3 [shape = 'u8[32768]{0}', space=vmem, size = 0x8000, scoped, tag = 'input window, operand 5, single buffered']
    #allocation4 [shape = 's32[1]{0}', space=sflag, size = 0x4, scoped, tag = 'scoped memory for tpu_custom_call.1']
    %15 = vsyncpa [#allocation4], 0
    // Predicated region
    $region2: #{tpu_custom_call.1} parent=1 // pred_check
      _
    $region3: #{tpu_custom_call.1} parent=1 // pred_check_branch
      %17 = sbr.rel (0) target = $region5
    $region4: #{tpu_custom_call.1} parent=1 // pred_region
      _
    $region5: #{tpu_custom_call.1} parent=1 // pred_fallthru
      _
    // Predicated region
    $region6: #{tpu_custom_call.1} parent=1 // pred_check
      _
    $region7: #{tpu_custom_call.1} parent=1 // pred_check_branch
      %19 = sbr.rel (0) target = $region9
    $region8: #{tpu_custom_call.1} parent=1 // pred_region
      _
    $region9: #{tpu_custom_call.1} parent=1 // pred_fallthru
      _
    // Predicated region
    $region10: #{tpu_custom_call.1} parent=1 // pred_check
      _
    $region11: #{tpu_custom_call.1} parent=1 // pred_check_branch
      %21 = sbr.rel (0) target = $region13
    $region12: #{tpu_custom_call.1} parent=1 // pred_region
      _
    $region13: #{tpu_custom_call.1} parent=1 // pred_fallthru
      _
    // Predicated region
    $region14: #{tpu_custom_call.1} parent=1 // pred_check
      _
    $region15: #{tpu_custom_call.1} parent=1 // pred_check_branch
      %23 = sbr.rel (0) target = $region17
    $region16: #{tpu_custom_call.1} parent=1 // pred_region
      _
    $region17: #{tpu_custom_call.1} parent=1 // pred_fallthru
      _
    // Predicated region
    $region18: #{tpu_custom_call.1} parent=1 // pred_check
      _
    $region19: #{tpu_custom_call.1} parent=1 // pred_check_branch
      %25 = sbr.rel (0) target = $region21
    $region20: #{tpu_custom_call.1} parent=1 // pred_region
      _
    $region21: #{tpu_custom_call.1} parent=1 // pred_fallthru
      _
    // Predicated region
    $region22: #{tpu_custom_call.1} parent=1 // pred_check
      _
    $region23: #{tpu_custom_call.1} parent=1 // pred_check_branch
      %27 = sbr.rel (0) target = $region25
    $region24: #{tpu_custom_call.1} parent=1 // pred_region
      %s29 = ssub.s32 1024, 1024
      %30 = vsyncadd [#allocation4], %s29
      %s31 = sshll.u32 [#allocation3], 4
      %s32 = int_to_ptr.vmem [resolvable:$true] %s31
      %37 = dma.hbm_to_vmem [thread:$0]  %s5, 1024, %s32, [#allocation4], 64, 64, 4
    $region25: #{tpu_custom_call.1} parent=1 // pred_fallthru
      _
    // Predicated region
    $region26: #{tpu_custom_call.1} parent=1 // pred_check
      _
    $region27: #{tpu_custom_call.1} parent=1 // pred_check_branch
      %39 = sbr.rel (0) target = $region29
    $region28: #{tpu_custom_call.1} parent=1 // pred_region
      _
    $region29: #{tpu_custom_call.1} parent=1 // pred_fallthru
      _
    // Predicated region
    $region30: #{tpu_custom_call.1} parent=1 // pred_check
      _
    $region31: #{tpu_custom_call.1} parent=1 // pred_check_branch
      %41 = sbr.rel (0) target = $region33
    $region32: #{tpu_custom_call.1} parent=1 // pred_region
      _
    $region33: #{tpu_custom_call.1} parent=1 // pred_fallthru
      _
    // Predicated region
    $region34: #{tpu_custom_call.1} parent=1 // pred_check
      _
    $region35: #{tpu_custom_call.1} parent=1 // pred_check_branch
      %43 = sbr.rel (0) target = $region37
    $region36: #{tpu_custom_call.1} parent=1 // pred_region
      _
    $region37: #{tpu_custom_call.1} parent=1 // pred_fallthru
      _
    // Predicated region
    $region38: #{tpu_custom_call.1} parent=1 // pred_check
      _
    $region39: #{tpu_custom_call.1} parent=1 // pred_check_branch
      %45 = sbr.rel (0) target = $region41
    $region40: #{tpu_custom_call.1} parent=1 // pred_region
      %46 = dma.done [#allocation4], 1024
    $region41: #{tpu_custom_call.1} parent=1 // pred_fallthru
      _
    %v48 = vld [vmem:[%s0] sm:$0xf]
    %v49 = vld [vmem:[%s0 + $0x4] sm:$0xf]
    %v50 = vld [vmem:[%s0 + $0x8] sm:$0xf]
    %v51 = vld [vmem:[%s0 + $0xc] sm:$0xf]
    %v52 = vld [vmem:[%s0 + $0x10] sm:$0xf]
    %v53 = vld [vmem:[%s0 + $0x14] sm:$0xf]
    %v54 = vld [vmem:[%s0 + $0x18] sm:$0xf]
    %v55 = vld [vmem:[%s0 + $0x1c] sm:$0xf]
    %v56 = vld [vmem:[%s0 + $0x20] sm:$0xf]
    %v57 = vld [vmem:[%s0 + $0x24] sm:$0xf]
    %v58 = vld [vmem:[%s0 + $0x28] sm:$0xf]
    %v59 = vld [vmem:[%s0 + $0x2c] sm:$0xf]
    %v60 = vld [vmem:[%s0 + $0x30] sm:$0xf]
    %v61 = vld [vmem:[%s0 + $0x34] sm:$0xf]
    %v62 = vld [vmem:[%s0 + $0x38] sm:$0xf]
    %v63 = vld [vmem:[%s0 + $0x3c] sm:$0xf]
    %v64 = vld [vmem:[%s1] sm:$0xf]
    %v65 = vld [vmem:[%s1 + $0x4] sm:$0xf]
    %v66 = vld [vmem:[%s1 + $0x8] sm:$0xf]
    %v67 = vld [vmem:[%s1 + $0xc] sm:$0xf]
    %v68 = vld [vmem:[%s2] sm:$0x1]
    %v70 = vlaneseq
    %v71 = vshrl.u32 %v70, 7
    %v72 = vsub.s32 0, %v71
    %v73 = vrot.slane %v68, %v72
    %v91 = vunpack.c.l.b16 %v48
    %v92 = vunpack.c.l.b16 %v49
    %v93 = vunpack.c.l.b16 %v50
    %v94 = vunpack.c.l.b16 %v51
    %v95 = vunpack.c.l.b16 %v52
    %v96 = vunpack.c.l.b16 %v53
    %v97 = vunpack.c.l.b16 %v54
    %v98 = vunpack.c.l.b16 %v55
    %v99 = vunpack.c.l.b16 %v56
    %v100 = vunpack.c.l.b16 %v57
    %v101 = vunpack.c.l.b16 %v58
    %v102 = vunpack.c.l.b16 %v59
    %v103 = vunpack.c.l.b16 %v60
    %v104 = vunpack.c.l.b16 %v61
    %v105 = vunpack.c.l.b16 %v62
    %v106 = vunpack.c.l.b16 %v63
    %v107 = vpack.c.b16 %v92, %v91
    %v108 = vpack.c.b16 %v94, %v93
    %v109 = vpack.c.b16 %v96, %v95
    %v110 = vpack.c.b16 %v98, %v97
    %v111 = vpack.c.b16 %v100, %v99
    %v112 = vpack.c.b16 %v102, %v101
    %v113 = vpack.c.b16 %v104, %v103
    %v114 = vpack.c.b16 %v106, %v105
    %v119 = vunpack.c.l.b16 %v64
    %v120 = vunpack.c.l.b16 %v65
    %v121 = vunpack.c.l.b16 %v66
    %v122 = vunpack.c.l.b16 %v67
    %v123 = vpack.c.b16 %v120, %v119
    %v124 = vpack.c.b16 %v122, %v121
    %vm127 = vcmask 261120
    %v129 = vsel %vm127, %v107, 0
    %v132 = vsel %vm127, %v108, 0
    %v135 = vsel %vm127, %v109, 0
    %v138 = vsel %vm127, %v110, 0
    %v141 = vsel %vm127, %v111, 0
    %v144 = vsel %vm127, %v112, 0
    %v147 = vsel %vm127, %v113, 0
    %v150 = vsel %vm127, %v114, 0
    %152 = vmatprep.subr.bf16.mxu0 0
    %153 = vmatpush1.bf16.msra.mxu0 0
    %154 = vmatprep.subr.bf16.mxu0 0
    %155 = vmatpush1.bf16.msra.mxu0 0
    %156 = vmatprep.subr.bf16.mxu0 0
    %157 = vmatpush1.bf16.msra.mxu0 0
    %158 = vmatprep.subr.bf16.mxu0 0
    %159 = vmatpush1.bf16.msra.mxu0 0
    %160 = vmatprep.subr.bf16.mxu0 0
    %161 = vmatpush1.bf16.msra.mxu0 0
    %162 = vmatprep.subr.bf16.mxu0 0
    %163 = vmatpush1.bf16.msra.mxu0 0
    %164 = vmatprep.subr.bf16.mxu0 0
    %165 = vmatpush1.bf16.msra.mxu0 %v124
    %166 = vmatprep.subr.bf16.mxu0 0
    %167 = vmatpush1.bf16.msra.mxu0 %v123
    %168 = vmatprep.subr.bf16.mxu0 0
    %169 = vmatpush2.bf16.msra.mxu0 0
    %170 = vmatprep.subr.bf16.mxu0 0
    %171 = vmatpush2.bf16.msra.mxu0 0
    %172 = vmatprep.subr.bf16.mxu0 0
    %173 = vmatpush2.bf16.msra.mxu0 0
    %174 = vmatprep.subr.bf16.mxu0 0
    %175 = vmatpush2.bf16.msra.mxu0 0
    %176 = vmatprep.subr.bf16.mxu0 0
    %177 = vmatpush2.bf16.msra.mxu0 0
    %178 = vmatprep.subr.bf16.mxu0 0
    %179 = vmatpush2.bf16.msra.mxu0 0
    %180 = vmatprep.subr.bf16.mxu0 0
    %181 = vmatpush2.bf16.msra.mxu0 0
    %182 = vmatprep.subr.bf16.mxu0 0
    %183 = vmatpush2.bf16.msra.mxu0 0
    %184 = vmatprep.mubr.bf16.mxu0 0
    %185 = vmatmul.mubr.bf16.gmra.mxu0 %v129
    %v186 = vpop.f32.mrf.mxu0
    %v187 = vadd.f32 %v73, %v186
    %v188 = vpop.f32.mrf.mxu0
    %v189 = vpop.f32.mrf.mxu0
    %v190 = vadd.f32 %v73, %v189
    %v191 = vpop.f32.mrf.mxu0
    %192 = vmatprep.mubr.bf16.mxu0 0
    %193 = vmatmul.mubr.bf16.gmra.mxu0 %v132
    %v194 = vpop.f32.mrf.mxu0
    %v195 = vadd.f32 %v73, %v194
    %v196 = vpop.f32.mrf.mxu0
    %v197 = vpop.f32.mrf.mxu0
    %v198 = vadd.f32 %v73, %v197
    %v199 = vpop.f32.mrf.mxu0
    %200 = vmatprep.mubr.bf16.mxu0 0
    %201 = vmatmul.mubr.bf16.gmra.mxu0 %v135
    %v202 = vpop.f32.mrf.mxu0
    %v203 = vadd.f32 %v73, %v202
    %v204 = vpop.f32.mrf.mxu0
    %v205 = vpop.f32.mrf.mxu0
    %v206 = vadd.f32 %v73, %v205
    %v207 = vpop.f32.mrf.mxu0
    %208 = vmatprep.mubr.bf16.mxu0 0
    %209 = vmatmul.mubr.bf16.gmra.mxu0 %v138
    %v210 = vpop.f32.mrf.mxu0
    %v211 = vadd.f32 %v73, %v210
    %v212 = vpop.f32.mrf.mxu0
    %v213 = vpop.f32.mrf.mxu0
    %v214 = vadd.f32 %v73, %v213
    %v215 = vpop.f32.mrf.mxu0
    %216 = vmatprep.mubr.bf16.mxu0 0
    %217 = vmatmul.mubr.bf16.gmra.mxu0 %v141
    %v218 = vpop.f32.mrf.mxu0
    %v219 = vadd.f32 %v73, %v218
    %v220 = vpop.f32.mrf.mxu0
    %v221 = vpop.f32.mrf.mxu0
    %v222 = vadd.f32 %v73, %v221
    %v223 = vpop.f32.mrf.mxu0
    %224 = vmatprep.mubr.bf16.mxu0 0
    %225 = vmatmul.mubr.bf16.gmra.mxu0 %v144
    %v226 = vpop.f32.mrf.mxu0
    %v227 = vadd.f32 %v73, %v226
    %v228 = vpop.f32.mrf.mxu0
    %v229 = vpop.f32.mrf.mxu0
    %v230 = vadd.f32 %v73, %v229
    %v231 = vpop.f32.mrf.mxu0
    %232 = vmatprep.mubr.bf16.mxu0 0
    %233 = vmatmul.mubr.bf16.gmra.mxu0 %v147
    %v234 = vpop.f32.mrf.mxu0
    %v235 = vadd.f32 %v73, %v234
    %v236 = vpop.f32.mrf.mxu0
    %v237 = vpop.f32.mrf.mxu0
    %v238 = vadd.f32 %v73, %v237
    %v239 = vpop.f32.mrf.mxu0
    %240 = vmatprep.mubr.bf16.mxu0 0
    %241 = vmatmul.mubr.bf16.gmra.mxu0 %v150
    %v242 = vpop.f32.mrf.mxu0
    %v243 = vadd.f32 %v73, %v242
    %v244 = vpop.f32.mrf.mxu0
    %v245 = vpop.f32.mrf.mxu0
    %v246 = vadd.f32 %v73, %v245
    %v247 = vpop.f32.mrf.mxu0
    %248 = vdwg.mxu0
    %v249 = vmax.f32 %v187, 0.0
    %v250 = vmax.f32 %v190, 0.0
    %v251 = vmax.f32 %v195, 0.0
    %v252 = vmax.f32 %v198, 0.0
    %v253 = vmax.f32 %v203, 0.0
    %v254 = vmax.f32 %v206, 0.0
    %v255 = vmax.f32 %v211, 0.0
    %v256 = vmax.f32 %v214, 0.0
    %v257 = vmax.f32 %v219, 0.0
    %v258 = vmax.f32 %v222, 0.0
    %v259 = vmax.f32 %v227, 0.0
    %v260 = vmax.f32 %v230, 0.0
    %v261 = vmax.f32 %v235, 0.0
    %v262 = vmax.f32 %v238, 0.0
    %v263 = vmax.f32 %v243, 0.0
    %v264 = vmax.f32 %v246, 0.0
    %v265 = vpack.c.bf16 %v250, %v249
    %v266 = vpack.c.bf16 %v252, %v251
    %v267 = vpack.c.bf16 %v254, %v253
    %v268 = vpack.c.bf16 %v256, %v255
    %v269 = vpack.c.bf16 %v258, %v257
    %v270 = vpack.c.bf16 %v260, %v259
    %v271 = vpack.c.bf16 %v262, %v261
    %v272 = vpack.c.bf16 %v264, %v263
    %v273 = vld [vmem:[%s3] sm:$0xf]
    %v274 = vld [vmem:[%s3 + $0x4] sm:$0xf]
    %v275 = vld [vmem:[%s3 + $0x8] sm:$0xf]
    %v276 = vld [vmem:[%s3 + $0xc] sm:$0xf]
    %v277 = vld [vmem:[%s3 + $0x10] sm:$0xf]
    %v278 = vld [vmem:[%s3 + $0x14] sm:$0xf]
    %v279 = vld [vmem:[%s3 + $0x18] sm:$0xf]
    %v280 = vld [vmem:[%s3 + $0x1c] sm:$0xf]
    %v281 = vld [vmem:[%s3 + $0x20] sm:$0xf]
    %v282 = vld [vmem:[%s3 + $0x24] sm:$0xf]
    %v283 = vld [vmem:[%s3 + $0x28] sm:$0xf]
    %v284 = vld [vmem:[%s3 + $0x2c] sm:$0xf]
    %v285 = vld [vmem:[%s3 + $0x30] sm:$0xf]
    %v286 = vld [vmem:[%s3 + $0x34] sm:$0xf]
    %v287 = vld [vmem:[%s3 + $0x38] sm:$0xf]
    %v288 = vld [vmem:[%s3 + $0x3c] sm:$0xf]
    %v289 = vld [vmem:[%s4] sm:$0x1]
    %v291 = vlaneseq
    %v292 = vshrl.u32 %v291, 7
    %v293 = vsub.s32 0, %v292
    %v294 = vrot.slane %v289, %v293
    %v312 = vunpack.c.l.b16 %v273
    %v313 = vunpack.c.l.b16 %v274
    %v314 = vunpack.c.l.b16 %v275
    %v315 = vunpack.c.l.b16 %v276
    %v316 = vunpack.c.l.b16 %v277
    %v317 = vunpack.c.l.b16 %v278
    %v318 = vunpack.c.l.b16 %v279
    %v319 = vunpack.c.l.b16 %v280
    %v320 = vunpack.c.l.b16 %v281
    %v321 = vunpack.c.l.b16 %v282
    %v322 = vunpack.c.l.b16 %v283
    %v323 = vunpack.c.l.b16 %v284
    %v324 = vunpack.c.l.b16 %v285
    %v325 = vunpack.c.l.b16 %v286
    %v326 = vunpack.c.l.b16 %v287
    %v327 = vunpack.c.l.b16 %v288
    %v328 = vpack.c.b16 %v313, %v312
    %v329 = vpack.c.b16 %v315, %v314
    %v330 = vpack.c.b16 %v317, %v316
    %v331 = vpack.c.b16 %v319, %v318
    %v332 = vpack.c.b16 %v321, %v320
    %v333 = vpack.c.b16 %v323, %v322
    %v334 = vpack.c.b16 %v325, %v324
    %v335 = vpack.c.b16 %v327, %v326
    %344 = vmatprep.subr.bf16.mxu0 0
    %345 = vmatpush1.bf16.msra.mxu0 %v335
    %346 = vmatprep.subr.bf16.mxu0 0
    %347 = vmatpush1.bf16.msra.mxu0 %v334
    %348 = vmatprep.subr.bf16.mxu0 0
    %349 = vmatpush1.bf16.msra.mxu0 %v333
    %350 = vmatprep.subr.bf16.mxu0 0
    %351 = vmatpush1.bf16.msra.mxu0 %v332
    %352 = vmatprep.subr.bf16.mxu0 0
    %353 = vmatpush1.bf16.msra.mxu0 %v331
    %354 = vmatprep.subr.bf16.mxu0 0
    %355 = vmatpush1.bf16.msra.mxu0 %v330
    %356 = vmatprep.subr.bf16.mxu0 0
    %357 = vmatpush1.bf16.msra.mxu0 %v329
    %358 = vmatprep.subr.bf16.mxu0 0
    %359 = vmatpush1.bf16.msra.mxu0 %v328
    %360 = vmatprep.subr.bf16.mxu0 0
    %361 = vmatpush2.bf16.msra.mxu0 0
    %362 = vmatprep.subr.bf16.mxu0 0
    %363 = vmatpush2.bf16.msra.mxu0 0
    %364 = vmatprep.subr.bf16.mxu0 0
    %365 = vmatpush2.bf16.msra.mxu0 0
    %366 = vmatprep.subr.bf16.mxu0 0
    %367 = vmatpush2.bf16.msra.mxu0 0
    %368 = vmatprep.subr.bf16.mxu0 0
    %369 = vmatpush2.bf16.msra.mxu0 0
    %370 = vmatprep.subr.bf16.mxu0 0
    %371 = vmatpush2.bf16.msra.mxu0 0
    %372 = vmatprep.subr.bf16.mxu0 0
    %373 = vmatpush2.bf16.msra.mxu0 0
    %374 = vmatprep.subr.bf16.mxu0 0
    %375 = vmatpush2.bf16.msra.mxu0 0
    %376 = vmatprep.mubr.bf16.mxu0 0
    %377 = vmatmul.mubr.bf16.gmra.mxu0 %v265
    %v378 = vpop.f32.mrf.mxu0
    %v379 = vadd.f32 %v294, %v378
    %v380 = vpop.f32.mrf.mxu0
    %v381 = vpop.f32.mrf.mxu0
    %v382 = vadd.f32 %v294, %v381
    %v383 = vpop.f32.mrf.mxu0
    %384 = vmatprep.mubr.bf16.mxu0 0
    %385 = vmatmul.mubr.bf16.gmra.mxu0 %v266
    %v386 = vpop.f32.mrf.mxu0
    %v387 = vadd.f32 %v294, %v386
    %v388 = vpop.f32.mrf.mxu0
    %v389 = vpop.f32.mrf.mxu0
    %v390 = vadd.f32 %v294, %v389
    %v391 = vpop.f32.mrf.mxu0
    %392 = vmatprep.mubr.bf16.mxu0 0
    %393 = vmatmul.mubr.bf16.gmra.mxu0 %v267
    %v394 = vpop.f32.mrf.mxu0
    %v395 = vadd.f32 %v294, %v394
    %v396 = vpop.f32.mrf.mxu0
    %v397 = vpop.f32.mrf.mxu0
    %v398 = vadd.f32 %v294, %v397
    %v399 = vpop.f32.mrf.mxu0
    %400 = vmatprep.mubr.bf16.mxu0 0
    %401 = vmatmul.mubr.bf16.gmra.mxu0 %v268
    %v402 = vpop.f32.mrf.mxu0
    %v403 = vadd.f32 %v294, %v402
    %v404 = vpop.f32.mrf.mxu0
    %v405 = vpop.f32.mrf.mxu0
    %v406 = vadd.f32 %v294, %v405
    %v407 = vpop.f32.mrf.mxu0
    %408 = vmatprep.mubr.bf16.mxu0 0
    %409 = vmatmul.mubr.bf16.gmra.mxu0 %v269
    %v410 = vpop.f32.mrf.mxu0
    %v411 = vadd.f32 %v294, %v410
    %v412 = vpop.f32.mrf.mxu0
    %v413 = vpop.f32.mrf.mxu0
    %v414 = vadd.f32 %v294, %v413
    %v415 = vpop.f32.mrf.mxu0
    %416 = vmatprep.mubr.bf16.mxu0 0
    %417 = vmatmul.mubr.bf16.gmra.mxu0 %v270
    %v418 = vpop.f32.mrf.mxu0
    %v419 = vadd.f32 %v294, %v418
    %v420 = vpop.f32.mrf.mxu0
    %v421 = vpop.f32.mrf.mxu0
    %v422 = vadd.f32 %v294, %v421
    %v423 = vpop.f32.mrf.mxu0
    %424 = vmatprep.mubr.bf16.mxu0 0
    %425 = vmatmul.mubr.bf16.gmra.mxu0 %v271
    %v426 = vpop.f32.mrf.mxu0
    %v427 = vadd.f32 %v294, %v426
    %v428 = vpop.f32.mrf.mxu0
    %v429 = vpop.f32.mrf.mxu0
    %v430 = vadd.f32 %v294, %v429
    %v431 = vpop.f32.mrf.mxu0
    %432 = vmatprep.mubr.bf16.mxu0 0
    %433 = vmatmul.mubr.bf16.gmra.mxu0 %v272
    %v434 = vpop.f32.mrf.mxu0
    %v435 = vadd.f32 %v294, %v434
    %v436 = vpop.f32.mrf.mxu0
    %v437 = vpop.f32.mrf.mxu0
    %v438 = vadd.f32 %v294, %v437
    %v439 = vpop.f32.mrf.mxu0
    %440 = vdwg.mxu0
    %v441 = vmax.f32 %v379, 0.0
    %v442 = vmax.f32 %v382, 0.0
    %v443 = vmax.f32 %v387, 0.0
    %v444 = vmax.f32 %v390, 0.0
    %v445 = vmax.f32 %v395, 0.0
    %v446 = vmax.f32 %v398, 0.0
    %v447 = vmax.f32 %v403, 0.0
    %v448 = vmax.f32 %v406, 0.0
    %v449 = vmax.f32 %v411, 0.0
    %v450 = vmax.f32 %v414, 0.0
    %v451 = vmax.f32 %v419, 0.0
    %v452 = vmax.f32 %v422, 0.0
    %v453 = vmax.f32 %v427, 0.0
    %v454 = vmax.f32 %v430, 0.0
    %v455 = vmax.f32 %v435, 0.0
    %v456 = vmax.f32 %v438, 0.0
    %v457 = vpack.c.bf16 %v442, %v441
    %v458 = vpack.c.bf16 %v444, %v443
    %v459 = vpack.c.bf16 %v446, %v445
    %v460 = vpack.c.bf16 %v448, %v447
    %v461 = vpack.c.bf16 %v450, %v449
    %v462 = vpack.c.bf16 %v452, %v451
    %v463 = vpack.c.bf16 %v454, %v453
    %v464 = vpack.c.bf16 %v456, %v455
    %v465 = vld [vmem:[#allocation3] sm:$0xf]
    %v466 = vld [vmem:[#allocation3 + $0x4] sm:$0xf]
    %v467 = vld [vmem:[#allocation3 + $0x8] sm:$0xf]
    %v468 = vld [vmem:[#allocation3 + $0xc] sm:$0xf]
    %v469 = vld [vmem:[#allocation3 + $0x10] sm:$0xf]
    %v470 = vld [vmem:[#allocation3 + $0x14] sm:$0xf]
    %v471 = vld [vmem:[#allocation3 + $0x18] sm:$0xf]
    %v472 = vld [vmem:[#allocation3 + $0x1c] sm:$0xf]
    %v473 = vld [vmem:[#allocation3 + $0x20] sm:$0xf]
    %v474 = vld [vmem:[#allocation3 + $0x24] sm:$0xf]
    %v475 = vld [vmem:[#allocation3 + $0x28] sm:$0xf]
    %v476 = vld [vmem:[#allocation3 + $0x2c] sm:$0xf]
    %v477 = vld [vmem:[#allocation3 + $0x30] sm:$0xf]
    %v478 = vld [vmem:[#allocation3 + $0x34] sm:$0xf]
    %v479 = vld [vmem:[#allocation3 + $0x38] sm:$0xf]
    %v480 = vld [vmem:[#allocation3 + $0x3c] sm:$0xf]
    %v481 = vld [vmem:[%s6] sm:$0x1]
    %v483 = vlaneseq
    %v484 = vshrl.u32 %v483, 7
    %v485 = vsub.s32 0, %v484
    %v486 = vrot.slane %v481, %v485
    %v504 = vunpack.c.l.b16 %v465
    %v505 = vunpack.c.l.b16 %v466
    %v506 = vunpack.c.l.b16 %v467
    %v507 = vunpack.c.l.b16 %v468
    %v508 = vunpack.c.l.b16 %v469
    %v509 = vunpack.c.l.b16 %v470
    %v510 = vunpack.c.l.b16 %v471
    %v511 = vunpack.c.l.b16 %v472
    %v512 = vunpack.c.l.b16 %v473
    %v513 = vunpack.c.l.b16 %v474
    %v514 = vunpack.c.l.b16 %v475
    %v515 = vunpack.c.l.b16 %v476
    %v516 = vunpack.c.l.b16 %v477
    %v517 = vunpack.c.l.b16 %v478
    %v518 = vunpack.c.l.b16 %v479
    %v519 = vunpack.c.l.b16 %v480
    %v520 = vpack.c.b16 %v505, %v504
    %v521 = vpack.c.b16 %v507, %v506
    %v522 = vpack.c.b16 %v509, %v508
    %v523 = vpack.c.b16 %v511, %v510
    %v524 = vpack.c.b16 %v513, %v512
    %v525 = vpack.c.b16 %v515, %v514
    %v526 = vpack.c.b16 %v517, %v516
    %v527 = vpack.c.b16 %v519, %v518
    %536 = vmatprep.subr.bf16.mxu0 0
    %537 = vmatpush1.bf16.msra.mxu0 %v527
    %538 = vmatprep.subr.bf16.mxu0 0
    %539 = vmatpush1.bf16.msra.mxu0 %v526
    %540 = vmatprep.subr.bf16.mxu0 0
    %541 = vmatpush1.bf16.msra.mxu0 %v525
    %542 = vmatprep.subr.bf16.mxu0 0
    %543 = vmatpush1.bf16.msra.mxu0 %v524
    %544 = vmatprep.subr.bf16.mxu0 0
    %545 = vmatpush1.bf16.msra.mxu0 %v523
    %546 = vmatprep.subr.bf16.mxu0 0
    %547 = vmatpush1.bf16.msra.mxu0 %v522
    %548 = vmatprep.subr.bf16.mxu0 0
    %549 = vmatpush1.bf16.msra.mxu0 %v521
    %550 = vmatprep.subr.bf16.mxu0 0
    %551 = vmatpush1.bf16.msra.mxu0 %v520
    %552 = vmatprep.subr.bf16.mxu0 0
    %553 = vmatpush2.bf16.msra.mxu0 0
    %554 = vmatprep.subr.bf16.mxu0 0
    %555 = vmatpush2.bf16.msra.mxu0 0
    %556 = vmatprep.subr.bf16.mxu0 0
    %557 = vmatpush2.bf16.msra.mxu0 0
    %558 = vmatprep.subr.bf16.mxu0 0
    %559 = vmatpush2.bf16.msra.mxu0 0
    %560 = vmatprep.subr.bf16.mxu0 0
    %561 = vmatpush2.bf16.msra.mxu0 0
    %562 = vmatprep.subr.bf16.mxu0 0
    %563 = vmatpush2.bf16.msra.mxu0 0
    %564 = vmatprep.subr.bf16.mxu0 0
    %565 = vmatpush2.bf16.msra.mxu0 0
    %566 = vmatprep.subr.bf16.mxu0 0
    %567 = vmatpush2.bf16.msra.mxu0 0
    %568 = vmatprep.mubr.bf16.mxu0 0
    %569 = vmatmul.mubr.bf16.gmra.mxu0 %v457
    %v570 = vpop.f32.mrf.mxu0
    %v571 = vadd.f32 %v486, %v570
    %v572 = vpop.f32.mrf.mxu0
    %v573 = vpop.f32.mrf.mxu0
    %v574 = vadd.f32 %v486, %v573
    %v575 = vpop.f32.mrf.mxu0
    %576 = vmatprep.mubr.bf16.mxu0 0
    %577 = vmatmul.mubr.bf16.gmra.mxu0 %v458
    %v578 = vpop.f32.mrf.mxu0
    %v579 = vadd.f32 %v486, %v578
    %v580 = vpop.f32.mrf.mxu0
    %v581 = vpop.f32.mrf.mxu0
    %v582 = vadd.f32 %v486, %v581
    %v583 = vpop.f32.mrf.mxu0
    %584 = vmatprep.mubr.bf16.mxu0 0
    %585 = vmatmul.mubr.bf16.gmra.mxu0 %v459
    %v586 = vpop.f32.mrf.mxu0
    %v587 = vadd.f32 %v486, %v586
    %v588 = vpop.f32.mrf.mxu0
    %v589 = vpop.f32.mrf.mxu0
    %v590 = vadd.f32 %v486, %v589
    %v591 = vpop.f32.mrf.mxu0
    %592 = vmatprep.mubr.bf16.mxu0 0
    %593 = vmatmul.mubr.bf16.gmra.mxu0 %v460
    %v594 = vpop.f32.mrf.mxu0
    %v595 = vadd.f32 %v486, %v594
    %v596 = vpop.f32.mrf.mxu0
    %v597 = vpop.f32.mrf.mxu0
    %v598 = vadd.f32 %v486, %v597
    %v599 = vpop.f32.mrf.mxu0
    %600 = vmatprep.mubr.bf16.mxu0 0
    %601 = vmatmul.mubr.bf16.gmra.mxu0 %v461
    %v602 = vpop.f32.mrf.mxu0
    %v603 = vadd.f32 %v486, %v602
    %v604 = vpop.f32.mrf.mxu0
    %v605 = vpop.f32.mrf.mxu0
    %v606 = vadd.f32 %v486, %v605
    %v607 = vpop.f32.mrf.mxu0
    %608 = vmatprep.mubr.bf16.mxu0 0
    %609 = vmatmul.mubr.bf16.gmra.mxu0 %v462
    %v610 = vpop.f32.mrf.mxu0
    %v611 = vadd.f32 %v486, %v610
    %v612 = vpop.f32.mrf.mxu0
    %v613 = vpop.f32.mrf.mxu0
    %v614 = vadd.f32 %v486, %v613
    %v615 = vpop.f32.mrf.mxu0
    %616 = vmatprep.mubr.bf16.mxu0 0
    %617 = vmatmul.mubr.bf16.gmra.mxu0 %v463
    %v618 = vpop.f32.mrf.mxu0
    %v619 = vadd.f32 %v486, %v618
    %v620 = vpop.f32.mrf.mxu0
    %v621 = vpop.f32.mrf.mxu0
    %v622 = vadd.f32 %v486, %v621
    %v623 = vpop.f32.mrf.mxu0
    %624 = vmatprep.mubr.bf16.mxu0 0
    %625 = vmatmul.mubr.bf16.gmra.mxu0 %v464
    %v626 = vpop.f32.mrf.mxu0
    %v627 = vadd.f32 %v486, %v626
    %v628 = vpop.f32.mrf.mxu0
    %v629 = vpop.f32.mrf.mxu0
    %v630 = vadd.f32 %v486, %v629
    %v631 = vpop.f32.mrf.mxu0
    %632 = vdwg.mxu0
    %v633 = vmax.f32 %v571, 0.0
    %v634 = vmax.f32 %v574, 0.0
    %v635 = vmax.f32 %v579, 0.0
    %v636 = vmax.f32 %v582, 0.0
    %v637 = vmax.f32 %v587, 0.0
    %v638 = vmax.f32 %v590, 0.0
    %v639 = vmax.f32 %v595, 0.0
    %v640 = vmax.f32 %v598, 0.0
    %v641 = vmax.f32 %v603, 0.0
    %v642 = vmax.f32 %v606, 0.0
    %v643 = vmax.f32 %v611, 0.0
    %v644 = vmax.f32 %v614, 0.0
    %v645 = vmax.f32 %v619, 0.0
    %v646 = vmax.f32 %v622, 0.0
    %v647 = vmax.f32 %v627, 0.0
    %v648 = vmax.f32 %v630, 0.0
    %v649 = vld [vmem:[%s7] sm:$0x1]
    %v651 = vlaneseq
    %v652 = vshrl.u32 %v651, 7
    %v653 = vsub.s32 0, %v652
    %v654 = vrot.slane %v649, %v653
    %v656 = vmul.f32 %v633, %v654
    %v657 = vmul.f32 %v634, %v654
    %v658 = vmul.f32 %v635, %v654
    %v659 = vmul.f32 %v636, %v654
    %v660 = vmul.f32 %v637, %v654
    %v661 = vmul.f32 %v638, %v654
    %v662 = vmul.f32 %v639, %v654
    %v663 = vmul.f32 %v640, %v654
    %v664 = vmul.f32 %v641, %v654
    %v665 = vmul.f32 %v642, %v654
    %v666 = vmul.f32 %v643, %v654
    %v667 = vmul.f32 %v644, %v654
    %v668 = vmul.f32 %v645, %v654
    %v669 = vmul.f32 %v646, %v654
    %v670 = vmul.f32 %v647, %v654
    %v671 = vmul.f32 %v648, %v654
    %672 = vadd.xlane.f32.xlu0 %v656
    %v673 = vpop.xlane.xlu0 %672
    %674 = vadd.xlane.f32.xlu0 %v657
    %v675 = vpop.xlane.xlu0 %674
    %676 = vadd.xlane.f32.xlu0 %v658
    %v677 = vpop.xlane.xlu0 %676
    %678 = vadd.xlane.f32.xlu0 %v659
    %v679 = vpop.xlane.xlu0 %678
    %680 = vadd.xlane.f32.xlu0 %v660
    %v681 = vpop.xlane.xlu0 %680
    %682 = vadd.xlane.f32.xlu0 %v661
    %v683 = vpop.xlane.xlu0 %682
    %684 = vadd.xlane.f32.xlu0 %v662
    %v685 = vpop.xlane.xlu0 %684
    %686 = vadd.xlane.f32.xlu0 %v663
    %v687 = vpop.xlane.xlu0 %686
    %688 = vadd.xlane.f32.xlu0 %v664
    %v689 = vpop.xlane.xlu0 %688
    %690 = vadd.xlane.f32.xlu0 %v665
    %v691 = vpop.xlane.xlu0 %690
    %692 = vadd.xlane.f32.xlu0 %v666
    %v693 = vpop.xlane.xlu0 %692
    %694 = vadd.xlane.f32.xlu0 %v667
    %v695 = vpop.xlane.xlu0 %694
    %696 = vadd.xlane.f32.xlu0 %v668
    %v697 = vpop.xlane.xlu0 %696
    %698 = vadd.xlane.f32.xlu0 %v669
    %v699 = vpop.xlane.xlu0 %698
    %700 = vadd.xlane.f32.xlu0 %v670
    %v701 = vpop.xlane.xlu0 %700
    %702 = vadd.xlane.f32.xlu0 %v671
    %v703 = vpop.xlane.xlu0 %702
    %s704 = sld [smem:[#allocation2]]
    %v705 = vstv %s704
    %v706 = vadd.f32 %v673, %v705
    %v707 = vadd.f32 %v675, %v705
    %v708 = vadd.f32 %v677, %v705
    %v709 = vadd.f32 %v679, %v705
    %v710 = vadd.f32 %v681, %v705
    %v711 = vadd.f32 %v683, %v705
    %v712 = vadd.f32 %v685, %v705
    %v713 = vadd.f32 %v687, %v705
    %v714 = vadd.f32 %v689, %v705
    %v715 = vadd.f32 %v691, %v705
    %v716 = vadd.f32 %v693, %v705
    %v717 = vadd.f32 %v695, %v705
    %v718 = vadd.f32 %v697, %v705
    %v719 = vadd.f32 %v699, %v705
    %v720 = vadd.f32 %v701, %v705
    %v721 = vadd.f32 %v703, %v705
    %vm722 = vcmask 7168
    %723 = vst.msk [vmem:[%s9] sm:$0xff] %vm722, %v706
    %724 = vst.msk [vmem:[%s9 + $0x8] sm:$0xff] %vm722, %v707
    %725 = vst.msk [vmem:[%s9 + $0x10] sm:$0xff] %vm722, %v708
    %726 = vst.msk [vmem:[%s9 + $0x18] sm:$0xff] %vm722, %v709
    %727 = vst.msk [vmem:[%s9 + $0x20] sm:$0xff] %vm722, %v710
    %728 = vst.msk [vmem:[%s9 + $0x28] sm:$0xff] %vm722, %v711
    %729 = vst.msk [vmem:[%s9 + $0x30] sm:$0xff] %vm722, %v712
    %730 = vst.msk [vmem:[%s9 + $0x38] sm:$0xff] %vm722, %v713
    %731 = vst.msk [vmem:[%s9 + $0x40] sm:$0xff] %vm722, %v714
    %732 = vst.msk [vmem:[%s9 + $0x48] sm:$0xff] %vm722, %v715
    %733 = vst.msk [vmem:[%s9 + $0x50] sm:$0xff] %vm722, %v716
    %734 = vst.msk [vmem:[%s9 + $0x58] sm:$0xff] %vm722, %v717
    %735 = vst.msk [vmem:[%s9 + $0x60] sm:$0xff] %vm722, %v718
    %736 = vst.msk [vmem:[%s9 + $0x68] sm:$0xff] %vm722, %v719
    %737 = vst.msk [vmem:[%s9 + $0x70] sm:$0xff] %vm722, %v720
    %738 = vst.msk [vmem:[%s9 + $0x78] sm:$0xff] %vm722, %v721
    // Predicated region
    $region42: #{tpu_custom_call.1} parent=1 // pred_check
      _
    $region43: #{tpu_custom_call.1} parent=1 // pred_check_branch
      %740 = sbr.rel (0) target = $region45
    $region44: #{tpu_custom_call.1} parent=1 // pred_region
      _
    $region45: #{tpu_custom_call.1} parent=1 // pred_fallthru
      _
    // Predicated region
    $region46: #{tpu_custom_call.1} parent=1 // pred_check
      _
    $region47: #{tpu_custom_call.1} parent=1 // pred_check_branch
      %742 = sbr.rel (0) target = $region49
    $region48: #{tpu_custom_call.1} parent=1 // pred_region
      _
    $region49: #{tpu_custom_call.1} parent=1 // pred_fallthru
      _
    %743 = vsyncpa [#allocation4], 1

</llo_original>
